<compile_context>
chip_gen: v7x
topology: tpu7x:2x2x1
jax: 0.10.0
libtpu: 0.0.40
codegen_flags: <defaults>
</compile_context>

<pallas_src>
from functools import partial

import jax
import jax.numpy as jnp
from jax.experimental import pallas as pl
from jax.experimental.pallas import tpu as pltpu

_EPS = 1e-5


def _vmem_capacity_bytes():
    try:
        info = pltpu.get_tpu_info()
        cap = getattr(info, "vmem_capacity_bytes", None)
        if cap:
            return int(cap)
    except Exception:
        pass
    return 128 * 1024 * 1024


_VMEM_CAP = _vmem_capacity_bytes()
# leave headroom for Pallas double buffers / compiler scratch (esp. 64 MiB v7x)
_VMEM_LIMIT = max(32 * 1024 * 1024,
                  min(int(_VMEM_CAP * 0.82), _VMEM_CAP - 20 * 1024 * 1024))


def _cp(n_axes):
    return pltpu.CompilerParams(
        dimension_semantics=("parallel",) * n_axes,
        vmem_limit_bytes=_VMEM_LIMIT,
    )


def _time_tile(Tp):
    for t in (512, 256):
        if Tp % t == 0:
            return t
    return 128


# ----------------------------------------------------------------------------
# Kernel 1: encoder matmul + cLN + bottleneck 1x1 conv (fused, time-tiled)
# ----------------------------------------------------------------------------
def _encoder_kernel(fr_ref, ew_ref, eb_ref, g_ref, b_ref, bw_ref, bb_ref,
                    w_out_ref, e_out_ref, *, T_valid):
    fr = fr_ref[0]                                        # (L, tile_t) f32
    tile_t = fr.shape[1]
    t0 = pl.program_id(1) * tile_t
    iota = jax.lax.broadcasted_iota(jnp.int32, (1, tile_t), 1)
    valid = (t0 + iota) < T_valid

    # encoder Conv1d(1, N, L, stride=L//2) as a framed matmul (bf16, f32 acc)
    w = jnp.dot(ew_ref[...], fr.astype(jnp.bfloat16),
                preferred_element_type=jnp.float32) + eb_ref[...]
    w = jnp.where(valid, w, 0.0)
    w_out_ref[0] = w.astype(w_out_ref.dtype)

    # channel-wise LayerNorm (normalize over channels, per time column)
    mean = jnp.mean(w, axis=0, keepdims=True)
    var = jnp.maximum(jnp.mean(w * w, axis=0, keepdims=True) - mean * mean, 0.0)
    e0 = g_ref[...] * (w - mean) * jax.lax.rsqrt(var + _EPS) + b_ref[...]

    # bottleneck 1x1 conv (N -> Bc)
    e = jnp.dot(bw_ref[...], e0.astype(jnp.bfloat16),
                preferred_element_type=jnp.float32) + bb_ref[...]
    e_out_ref[0] = jnp.where(valid, e, 0.0).astype(e_out_ref.dtype)


def encoder_cln_bottleneck(frames, params, T_valid):
    Bn, L, Tp = frames.shape
    N = params["enc_w"].shape[0]
    Bc = params["bn_w"].shape[0]
    tt = _time_tile(Tp)
    return pl.pallas_call(
        partial(_encoder_kernel, T_valid=T_valid),
        out_shape=(jax.ShapeDtypeStruct((Bn, N, Tp), jnp.bfloat16),
                   jax.ShapeDtypeStruct((Bn, Bc, Tp), jnp.bfloat16)),
        grid=(Bn, Tp // tt),
        in_specs=[
            pl.BlockSpec((1, L, tt), lambda i, j: (i, 0, j)),
            pl.BlockSpec((N, L), lambda i, j: (0, 0)),
            pl.BlockSpec((N, 1), lambda i, j: (0, 0)),
            pl.BlockSpec((N, 1), lambda i, j: (0, 0)),
            pl.BlockSpec((N, 1), lambda i, j: (0, 0)),
            pl.BlockSpec((Bc, N), lambda i, j: (0, 0)),
            pl.BlockSpec((Bc, 1), lambda i, j: (0, 0)),
        ],
        out_specs=(pl.BlockSpec((1, N, tt), lambda i, j: (i, 0, j)),
                   pl.BlockSpec((1, Bc, tt), lambda i, j: (i, 0, j))),
        compiler_params=_cp(2),
    )(frames, params["enc_w"], params["enc_b"], params["ln_g"], params["ln_b"],
      params["bn_w"], params["bn_b"])


# ----------------------------------------------------------------------------
# Kernel 2: fused stack of TCN Conv1DBlocks (residual path, e resident in VMEM)
# ----------------------------------------------------------------------------
def _tcn_stack_kernel(alphas_ref, e_ref, w1s_ref, wss_ref, hpk_ref, bss_ref,
                      eo_ref, e_acc, *, P, dils, T_valid):
    Tp = e_ref.shape[2]
    H = w1s_ref.shape[1]
    iota = jax.lax.broadcasted_iota(jnp.int32, (1, Tp), 1)
    valid = iota < T_valid
    inv_n = 1.0 / float(H * T_valid)                       # 1 / (H * T)

    e_acc[...] = e_ref[0].astype(jnp.float32)              # f32 residual state

    def prelu_gln(y, a, g, b):
        # PReLU (scalar alpha) + global layer norm; output masked to valid T so
        # downstream rolls / residual adds never touch garbage columns.
        y = jnp.where(y >= 0, y, a * y)
        ym = jnp.where(valid, y, 0.0)
        mean = jnp.sum(ym) * inv_n
        var = jnp.maximum(jnp.sum(ym * ym) * inv_n - mean * mean, 0.0)
        return jnp.where(
            valid, g * (ym - mean) * jax.lax.rsqrt(var + _EPS) + b, 0.0)

    for i, dil in enumerate(dils):                         # static unroll
        hv = hpk_ref[i]                                    # (H, 6+P) f32 slab
        b1, g1, be1 = hv[:, 0:1], hv[:, 1:2], hv[:, 2:3]
        bd, g2, be2 = hv[:, 3:4], hv[:, 4:5], hv[:, 5:6]
        a1 = alphas_ref[i, 0]
        a2 = alphas_ref[i, 1]

        # 1x1 conv (Bc -> H), bf16 MXU with f32 accumulation
        y = jnp.dot(w1s_ref[i], e_acc[...].astype(jnp.bfloat16),
                    preferred_element_type=jnp.float32) + b1
        y = prelu_gln(y, a1, g1, be1)                      # zero outside valid

        # dilated depthwise conv: Tp >= T_valid + dil*(P-1)//2 guarantees the
        # rolls only wrap zeroed columns, so no per-tap masking is needed.
        pad = dil * (P - 1) // 2
        acc = jnp.zeros_like(y)
        for p in range(P):
            s = p * dil - pad                              # static shift
            shifted = y if s == 0 else pltpu.roll(y, shift=(-s) % Tp, axis=1)
            acc = acc + hv[:, 6 + p:7 + p] * shifted
        y = prelu_gln(acc + bd, a2, g2, be2)

        # sconv 1x1 (H -> Bc) + residual add; padded columns stay zero
        out = jnp.dot(wss_ref[i], y.astype(jnp.bfloat16),
                      preferred_element_type=jnp.float32) + bss_ref[i]
        e_acc[...] = jnp.where(valid, e_acc[...] + out, 0.0)

    eo_ref[0] = e_acc[...].astype(eo_ref.dtype)


def _tcn_chunk_call(e, alphas, w1s, wss, hpk, bss, *, dils, P, T_valid):
    Bn, Bc, Tp = e.shape
    nblk, H, _ = w1s.shape
    NV = 6 + P
    return pl.pallas_call(
        partial(_tcn_stack_kernel, P=P, dils=dils, T_valid=T_valid),
        out_shape=jax.ShapeDtypeStruct((Bn, Bc, Tp), jnp.bfloat16),
        grid=(Bn,),
        in_specs=[
            pl.BlockSpec(memory_space=pltpu.MemorySpace.SMEM),   # PReLU alphas
            pl.BlockSpec((1, Bc, Tp), lambda i: (i, 0, 0)),
            pl.BlockSpec((nblk, H, Bc), lambda i: (0, 0, 0)),
            pl.BlockSpec((nblk, Bc, H), lambda i: (0, 0, 0)),
            pl.BlockSpec((nblk, H, NV), lambda i: (0, 0, 0)),
            pl.BlockSpec((nblk, Bc, 1), lambda i: (0, 0, 0)),
        ],
        out_specs=pl.BlockSpec((1, Bc, Tp), lambda i: (i, 0, 0)),
        scratch_shapes=[pltpu.VMEM((Bc, Tp), jnp.float32)],
        compiler_params=_cp(1),
    )(alphas, e, w1s, wss, hpk, bss)


# ----------------------------------------------------------------------------
# Kernel 3: mask generation + ReLU + decoder matmul (all speakers, time-tiled)
# ----------------------------------------------------------------------------
def _mask_decoder_kernel(e_ref, w_ref, mw_ref, mb_ref, dw_ref, fr_ref,
                         *, num_spks, N, L):
    e = e_ref[0]                                          # (Bc, tile_t) bf16
    tile_t = e.shape[1]
    w = w_ref[0].astype(jnp.float32)                      # (N, tile_t)
    m = jnp.dot(mw_ref[...], e,
                preferred_element_type=jnp.float32) + mb_ref[...]   # (S*N, tt)
    # speaker-concatenated masked features -> ONE lane-dense decoder matmul
    d = jnp.concatenate(
        [w * jnp.maximum(m[s * N:(s + 1) * N, :], 0.0) for s in range(num_spks)],
        axis=1).astype(jnp.bfloat16)                      # (N, S*tile_t)
    res = jnp.dot(dw_ref[...], d, preferred_element_type=jnp.float32)
    for s in range(num_spks):
        fr_ref[0, s * L:(s + 1) * L, :] = res[:, s * tile_t:(s + 1) * tile_t]


def mask_decode(e, w, params, num_spks):
    Bn, Bc, Tp = e.shape
    N = w.shape[1]
    L = params["dec_w"].shape[0]
    SN = num_spks * N
    tt = _time_tile(Tp)
    return pl.pallas_call(
        partial(_mask_decoder_kernel, num_spks=num_spks, N=N, L=L),
        out_shape=jax.ShapeDtypeStruct((Bn, num_spks * L, Tp), jnp.float32),
        grid=(Bn, Tp // tt),
        in_specs=[
            pl.BlockSpec((1, Bc, tt), lambda i, j: (i, 0, j)),
            pl.BlockSpec((1, N, tt), lambda i, j: (i, 0, j)),
            pl.BlockSpec((SN, Bc), lambda i, j: (0, 0)),
            pl.BlockSpec((SN, 1), lambda i, j: (0, 0)),
            pl.BlockSpec((L, N), lambda i, j: (0, 0)),
        ],
        out_specs=pl.BlockSpec((1, num_spks * L, tt), lambda i, j: (i, 0, j)),
        compiler_params=_cp(2),
    )(e, w, params["mask_w"], params["mask_b"], params["dec_w"])


# ----------------------------------------------------------------------------
# Parameter initialization (deterministic, synthetic; TCN weights pre-stacked)
# ----------------------------------------------------------------------------
def init_params(key, *, N, L, B, H, P, X, R, num_spks):
    nblk = R * X
    keys = iter(jax.random.split(key, 32))

    def nrm(shape, scale=0.1):
        return scale * jax.random.normal(next(keys), shape, jnp.float32)

    def bf16(x):
        return x.astype(jnp.bfloat16)

    params = {
        # encoder Conv1d(1, N, L): weight [N,1,L] -> [N, L]
        "enc_w": bf16(nrm((N, L))), "enc_b": nrm((N, 1)),
        # ChannelWiseLayerNorm(N)
        "ln_g": jnp.ones((N, 1), jnp.float32), "ln_b": jnp.zeros((N, 1), jnp.float32),
        # bottleneck Conv1D(N, B, 1)
        "bn_w": bf16(nrm((B, N))), "bn_b": nrm((B, 1)),
        # mask generator Conv1D(B, num_spks*N, 1)
        "mask_w": bf16(nrm((num_spks * N, B))), "mask_b": nrm((num_spks * N, 1)),
        # decoder ConvTranspose1d(N, 1, L): weight [N,1,L] -> [L, N]
        "dec_w": bf16(nrm((L, N))), "dec_b": nrm(()),
        "P": P, "X": X,
        "dils": tuple(2 ** (i % X) for i in range(nblk)),
    }

    # stacked TCN block parameters (leading block axis)
    params["w1s"] = bf16(nrm((nblk, H, B)))                 # conv1x1
    params["wss"] = bf16(nrm((nblk, B, H)))                 # sconv
    params["bss"] = nrm((nblk, B, 1))                       # sconv bias
    params["alphas"] = jnp.full((nblk, 2), 0.25, jnp.float32)   # PReLU init
    # packed per-block H-vector slab: [b1, g1, be1, bd, g2, be2, wd_0..wd_{P-1}]
    b1 = nrm((nblk, H, 1))
    g1 = jnp.ones((nblk, H, 1), jnp.float32)
    be1 = jnp.zeros((nblk, H, 1), jnp.float32)
    bd = nrm((nblk, H, 1))
    g2 = jnp.ones((nblk, H, 1), jnp.float32)
    be2 = jnp.zeros((nblk, H, 1), jnp.float32)
    wd = nrm((nblk, H, P))
    params["hpk"] = jnp.concatenate([b1, g1, be1, bd, g2, be2, wd], axis=2)
    return params


# ----------------------------------------------------------------------------
# ConvTasNet forward
# ----------------------------------------------------------------------------
def conv_tasnet_forward(params, x, *, L, num_spks, blocks_per_call=None):
    """x: [batch, samples]  (matches the PyTorch 2-D input path)."""
    assert L % 2 == 0, "filter length must be even for 50%-overlap framing"
    stride = L // 2
    Bn, S_in = x.shape
    T = (S_in - L) // stride + 1
    P = params["P"]
    dils = params["dils"]
    # pad time so pltpu.roll never wraps non-zero columns into valid outputs
    max_pad = max(dils) * (P - 1) // 2
    Tp = ((T + max_pad + 127) // 128) * 128

    # ---- framing via reshapes (50% overlap = two interleaved views) --------
    T_even = (T + 1) // 2
    T_odd = T // 2
    even = x[:, :T_even * L].reshape(Bn, T_even, L)
    if T_odd > 0:
        odd = x[:, stride:stride + T_odd * L].reshape(Bn, T_odd, L)
        if T_odd < T_even:
            odd = jnp.pad(odd, ((0, 0), (0, T_even - T_odd), (0, 0)))
        frames = jnp.stack([even, odd], axis=2).reshape(Bn, 2 * T_even, L)[:, :T]
    else:
        frames = even[:, :T]
    frames = jnp.transpose(frames, (0, 2, 1))               # [B, L, T]
    frames = jnp.pad(frames, ((0, 0), (0, 0), (0, Tp - T)))

    # ---- encoder + cLN + bottleneck (one fused kernel, bf16 outputs) -------
    w, e = encoder_cln_bottleneck(frames, params, T)         # [B,N,Tp], [B,Bc,Tp]

    # ---- separation: fused TCN Conv1DBlocks (residual path only) -----------
    # TODO(synk): the reference Conv1DBlock also computes a skip_out branch,
    # but its nn.Sequential wrapper discards it; only the residual path flows.
    nblk = len(dils)
    if blocks_per_call is None:
        # shallower fusion on 64-MiB-VMEM chips (v7x), full fusion elsewhere
        blocks_per_call = nblk if _VMEM_CAP > 80 * 1024 * 1024 else max(params["X"], 1)
    for s in range(0, nblk, blocks_per_call):
        sl = slice(s, s + blocks_per_call)
        e = _tcn_chunk_call(e, params["alphas"][sl], params["w1s"][sl],
                            params["wss"][sl], params["hpk"][sl],
                            params["bss"][sl],
                            dils=dils[sl], P=P, T_valid=T)

    # ---- masks + ReLU + decoder matmul for all speakers (one kernel) -------
    fr = mask_decode(e, w, params, num_spks)                 # [B, S*L, Tp]

    # ---- overlap-add / ConvTranspose1d via pad + add (no scatter) ----------
    fr = fr[:, :, :T].reshape(Bn, num_spks, L, T)
    fr = jnp.transpose(fr, (0, 1, 3, 2))                     # [B, S, T, L]
    fh = fr[..., :stride]                                    # first halves
    sh = fr[..., stride:]                                    # second halves
    seg = (jnp.pad(fh, ((0, 0), (0, 0), (0, 1), (0, 0))) +
           jnp.pad(sh, ((0, 0), (0, 0), (1, 0), (0, 0))))    # [B, S, T+1, stride]
    out = seg.reshape(Bn, num_spks, (T + 1) * stride) + params["dec_b"]
    return [out[:, s] for s in range(num_spks)]


# ----------------------------------------------------------------------------
if __name__ == "__main__":
    # Small hyper-parameters consistent with the module's forward.
    N, L, B, H, P, X, R, num_spks = 16, 8, 8, 16, 3, 2, 2, 2
    batch, samples = 2, 68          # -> T = (68 - 8) // 4 + 1 = 16 (padded to 128)

    key = jax.random.PRNGKey(0)
    pkey, xkey = jax.random.split(key)
    params = init_params(pkey, N=N, L=L, B=B, H=H, P=P, X=X, R=R, num_spks=num_spks)
    x = jax.random.normal(xkey, (batch, samples), jnp.float32)

    s = conv_tasnet_forward(params, x, L=L, num_spks=num_spks)
    s = jax.block_until_ready(s)
    assert len(s) == num_spks and s[0].shape == (batch, samples)
    assert all(bool(jnp.all(jnp.isfinite(si))) for si in s)
    print("KERNEL_OK")
</pallas_src>

<mosaic_0001>
module attributes {stable_mosaic.version = 11 : i64} {
  func.func @_encoder_kernel(%arg0: i32, %arg1: i32, %arg2: memref<1x8x128xf32, #tpu.memory_space<vmem>>, %arg3: memref<16x8xbf16, #tpu.memory_space<vmem>>, %arg4: memref<16x1xf32, #tpu.memory_space<vmem>>, %arg5: memref<16x1xf32, #tpu.memory_space<vmem>>, %arg6: memref<16x1xf32, #tpu.memory_space<vmem>>, %arg7: memref<8x16xbf16, #tpu.memory_space<vmem>>, %arg8: memref<8x1xf32, #tpu.memory_space<vmem>>, %arg9: memref<1x16x128xbf16, #tpu.memory_space<vmem>>, %arg10: memref<1x8x128xbf16, #tpu.memory_space<vmem>>) attributes {dimension_semantics = [#tpu.dimension_semantics<parallel>, #tpu.dimension_semantics<parallel>], iteration_bounds = array<i64: 2, 1>, scalar_prefetch = 0 : i64, scratch_operands = 0 : i64, tpu.core_type = #tpu.core_type<tc>, window_params = [{transform_indices = @transform_0, window_bounds = array<i64: 1, 8, 128>}, {pipeline_mode = #tpu.pipeline_mode<synchronous>, transform_indices = @transform_1, window_bounds = array<i64: 16, 8>}, {pipeline_mode = #tpu.pipeline_mode<synchronous>, transform_indices = @transform_2, window_bounds = array<i64: 16, 1>}, {pipeline_mode = #tpu.pipeline_mode<synchronous>, transform_indices = @transform_3, window_bounds = array<i64: 16, 1>}, {pipeline_mode = #tpu.pipeline_mode<synchronous>, transform_indices = @transform_4, window_bounds = array<i64: 16, 1>}, {pipeline_mode = #tpu.pipeline_mode<synchronous>, transform_indices = @transform_5, window_bounds = array<i64: 8, 16>}, {pipeline_mode = #tpu.pipeline_mode<synchronous>, transform_indices = @transform_6, window_bounds = array<i64: 8, 1>}, {transform_indices = @transform_7, window_bounds = array<i64: 1, 16, 128>}, {transform_indices = @transform_8, window_bounds = array<i64: 1, 8, 128>}]} {
    %c0 = arith.constant 0 : index
    %c0_0 = arith.constant 0 : index
    %c0_1 = arith.constant 0 : index
    %0 = vector.load %arg2[%c0, %c0_0, %c0_1] : memref<1x8x128xf32, #tpu.memory_space<vmem>>, vector<1x8x128xf32>
    %1 = vector.shape_cast %0 : vector<1x8x128xf32> to vector<8x128xf32>
    %c128_i32 = arith.constant 128 : i32
    %2 = arith.muli %arg1, %c128_i32 : i32
    %3 = tpu.iota {dimensions = array<i32: 1>} : vector<1x128xi32>
    %4 = vector.broadcast %2 : i32 to vector<1x128xi32>
    %5 = arith.addi %4, %3 : vector<1x128xi32>
    %c16_i32 = arith.constant 16 : i32
    %6 = vector.broadcast %c16_i32 : i32 to vector<1x128xi32>
    %7 = arith.cmpi slt, %5, %6 : vector<1x128xi32>
    %c0_2 = arith.constant 0 : index
    %c0_3 = arith.constant 0 : index
    %8 = vector.load %arg3[%c0_2, %c0_3] : memref<16x8xbf16, #tpu.memory_space<vmem>>, vector<16x8xbf16>
    %9 = arith.truncf %1 : vector<8x128xf32> to vector<8x128xbf16>
    %cst = arith.constant dense<0.000000e+00> : vector<16x128xf32>
    %10 = tpu.matmul %8, %9, %cst {dimension_numbers = #tpu.dot_dimension_numbers<[1], [0], [0], [1], [0, 0, 1, 1], [], []>} : vector<16x8xbf16>, vector<8x128xbf16>, vector<16x128xf32> -> vector<16x128xf32>
    %c0_4 = arith.constant 0 : index
    %c0_5 = arith.constant 0 : index
    %11 = vector.load %arg4[%c0_4, %c0_5] : memref<16x1xf32, #tpu.memory_space<vmem>>, vector<16x1xf32>
    %12 = vector.broadcast %11 : vector<16x1xf32> to vector<16x128xf32>
    %13 = arith.addf %10, %12 : vector<16x128xf32>
    %cst_6 = arith.constant 0.000000e+00 : f32
    %14 = vector.shape_cast %7 : vector<1x128xi1> to vector<1x128xi1>
    %15 = vector.broadcast %14 : vector<1x128xi1> to vector<16x128xi1>
    %16 = vector.broadcast %cst_6 : f32 to vector<16x128xf32>
    %17 = arith.select %15, %13, %16 : vector<16x128xi1>, vector<16x128xf32>
    %18 = arith.truncf %17 : vector<16x128xf32> to vector<16x128xbf16>
    %c0_7 = arith.constant 0 : index
    %c0_8 = arith.constant 0 : index
    %c0_9 = arith.constant 0 : index
    %19 = vector.load %arg9[%c0_7, %c0_8, %c0_9] : memref<1x16x128xbf16, #tpu.memory_space<vmem>>, vector<1x16x128xbf16>
    %20 = vector.shape_cast %19 : vector<1x16x128xbf16> to vector<16x128xbf16>
    %21 = vector.shape_cast %18 : vector<16x128xbf16> to vector<1x16x128xbf16>
    tpu.vector_store %arg9[%c0_7, %c0_8, %c0_9], %21 {strides = array<i32>} : memref<1x16x128xbf16, #tpu.memory_space<vmem>>, vector<1x16x128xbf16>,
    %cst_10 = arith.constant dense<0.000000e+00> : vector<128xf32>
    %22 = vector.multi_reduction <add>, %17, %cst_10 [0] : vector<16x128xf32> to vector<128xf32>
    %23 = vector.shape_cast %22 : vector<128xf32> to vector<1x128xf32>
    %cst_11 = arith.constant 1.600000e+01 : f32
    %24 = vector.broadcast %cst_11 : f32 to vector<1x128xf32>
    %25 = arith.divf %23, %24 : vector<1x128xf32>
    %26 = arith.mulf %17, %17 : vector<16x128xf32>
    %cst_12 = arith.constant dense<0.000000e+00> : vector<128xf32>
    %27 = vector.multi_reduction <add>, %26, %cst_12 [0] : vector<16x128xf32> to vector<128xf32>
    %28 = vector.shape_cast %27 : vector<128xf32> to vector<1x128xf32>
    %cst_13 = arith.constant 1.600000e+01 : f32
    %29 = vector.broadcast %cst_13 : f32 to vector<1x128xf32>
    %30 = arith.divf %28, %29 : vector<1x128xf32>
    %31 = arith.mulf %25, %25 : vector<1x128xf32>
    %32 = arith.subf %30, %31 : vector<1x128xf32>
    %cst_14 = arith.constant 0.000000e+00 : f32
    %33 = vector.broadcast %cst_14 : f32 to vector<1x128xf32>
    %34 = arith.maximumf %32, %33 : vector<1x128xf32>
    %c0_15 = arith.constant 0 : index
    %c0_16 = arith.constant 0 : index
    %35 = vector.load %arg5[%c0_15, %c0_16] : memref<16x1xf32, #tpu.memory_space<vmem>>, vector<16x1xf32>
    %36 = vector.broadcast %25 : vector<1x128xf32> to vector<16x128xf32>
    %37 = arith.subf %17, %36 : vector<16x128xf32>
    %38 = vector.broadcast %35 : vector<16x1xf32> to vector<16x128xf32>
    %39 = arith.mulf %38, %37 : vector<16x128xf32>
    %cst_17 = arith.constant 9.99999974E-6 : f32
    %40 = vector.broadcast %cst_17 : f32 to vector<1x128xf32>
    %41 = arith.addf %34, %40 : vector<1x128xf32>
    %42 = math.rsqrt %41 : vector<1x128xf32>
    %43 = vector.broadcast %42 : vector<1x128xf32> to vector<16x128xf32>
    %44 = arith.mulf %39, %43 : vector<16x128xf32>
    %c0_18 = arith.constant 0 : index
    %c0_19 = arith.constant 0 : index
    %45 = vector.load %arg6[%c0_18, %c0_19] : memref<16x1xf32, #tpu.memory_space<vmem>>, vector<16x1xf32>
    %46 = vector.broadcast %45 : vector<16x1xf32> to vector<16x128xf32>
    %47 = arith.addf %44, %46 : vector<16x128xf32>
    %c0_20 = arith.constant 0 : index
    %c0_21 = arith.constant 0 : index
    %48 = vector.load %arg7[%c0_20, %c0_21] : memref<8x16xbf16, #tpu.memory_space<vmem>>, vector<8x16xbf16>
    %49 = arith.truncf %47 : vector<16x128xf32> to vector<16x128xbf16>
    %cst_22 = arith.constant dense<0.000000e+00> : vector<8x128xf32>
    %50 = tpu.matmul %48, %49, %cst_22 {dimension_numbers = #tpu.dot_dimension_numbers<[1], [0], [0], [1], [0, 0, 1, 1], [], []>} : vector<8x16xbf16>, vector<16x128xbf16>, vector<8x128xf32> -> vector<8x128xf32>
    %c0_23 = arith.constant 0 : index
    %c0_24 = arith.constant 0 : index
    %51 = vector.load %arg8[%c0_23, %c0_24] : memref<8x1xf32, #tpu.memory_space<vmem>>, vector<8x1xf32>
    %52 = vector.broadcast %51 : vector<8x1xf32> to vector<8x128xf32>
    %53 = arith.addf %50, %52 : vector<8x128xf32>
    %cst_25 = arith.constant 0.000000e+00 : f32
    %54 = vector.shape_cast %7 : vector<1x128xi1> to vector<1x128xi1>
    %55 = vector.broadcast %54 : vector<1x128xi1> to vector<8x128xi1>
    %56 = vector.broadcast %cst_25 : f32 to vector<8x128xf32>
    %57 = arith.select %55, %53, %56 : vector<8x128xi1>, vector<8x128xf32>
    %58 = arith.truncf %57 : vector<8x128xf32> to vector<8x128xbf16>
    %c0_26 = arith.constant 0 : index
    %c0_27 = arith.constant 0 : index
    %c0_28 = arith.constant 0 : index
    %59 = vector.load %arg10[%c0_26, %c0_27, %c0_28] : memref<1x8x128xbf16, #tpu.memory_space<vmem>>, vector<1x8x128xbf16>
    %60 = vector.shape_cast %59 : vector<1x8x128xbf16> to vector<8x128xbf16>
    %61 = vector.shape_cast %58 : vector<8x128xbf16> to vector<1x8x128xbf16>
    tpu.vector_store %arg10[%c0_26, %c0_27, %c0_28], %61 {strides = array<i32>} : memref<1x8x128xbf16, #tpu.memory_space<vmem>>, vector<1x8x128xbf16>,
    return
  }
  func.func @transform_0(%arg0: i32, %arg1: i32) -> (i32, i32, i32) {
    %c0_i32 = arith.constant 0 : i32
    %c0_i32_0 = arith.constant 0 : i32
    return %arg0, %c0_i32, %arg1 : i32, i32, i32
  }
  func.func @transform_1(%arg0: i32, %arg1: i32) -> (i32, i32) {
    %c0_i32 = arith.constant 0 : i32
    %c0_i32_0 = arith.constant 0 : i32
    %c0_i32_1 = arith.constant 0 : i32
    return %c0_i32, %c0_i32_0 : i32, i32
  }
  func.func @transform_2(%arg0: i32, %arg1: i32) -> (i32, i32) {
    %c0_i32 = arith.constant 0 : i32
    %c0_i32_0 = arith.constant 0 : i32
    %c0_i32_1 = arith.constant 0 : i32
    return %c0_i32, %c0_i32_0 : i32, i32
  }
  func.func @transform_3(%arg0: i32, %arg1: i32) -> (i32, i32) {
    %c0_i32 = arith.constant 0 : i32
    %c0_i32_0 = arith.constant 0 : i32
    %c0_i32_1 = arith.constant 0 : i32
    return %c0_i32, %c0_i32_0 : i32, i32
  }
  func.func @transform_4(%arg0: i32, %arg1: i32) -> (i32, i32) {
    %c0_i32 = arith.constant 0 : i32
    %c0_i32_0 = arith.constant 0 : i32
    %c0_i32_1 = arith.constant 0 : i32
    return %c0_i32, %c0_i32_0 : i32, i32
  }
  func.func @transform_5(%arg0: i32, %arg1: i32) -> (i32, i32) {
    %c0_i32 = arith.constant 0 : i32
    %c0_i32_0 = arith.constant 0 : i32
    %c0_i32_1 = arith.constant 0 : i32
    return %c0_i32, %c0_i32_0 : i32, i32
  }
  func.func @transform_6(%arg0: i32, %arg1: i32) -> (i32, i32) {
    %c0_i32 = arith.constant 0 : i32
    %c0_i32_0 = arith.constant 0 : i32
    %c0_i32_1 = arith.constant 0 : i32
    return %c0_i32, %c0_i32_0 : i32, i32
  }
  func.func @transform_7(%arg0: i32, %arg1: i32) -> (i32, i32, i32) {
    %c0_i32 = arith.constant 0 : i32
    %c0_i32_0 = arith.constant 0 : i32
    return %arg0, %c0_i32, %arg1 : i32, i32, i32
  }
  func.func @transform_8(%arg0: i32, %arg1: i32) -> (i32, i32, i32) {
    %c0_i32 = arith.constant 0 : i32
    %c0_i32_0 = arith.constant 0 : i32
    return %arg0, %c0_i32, %arg1 : i32, i32, i32
  }
}

</mosaic_0001>

<llo_original>
// kernel: tpu_custom_call.1
$region0: #{tpu_custom_call.1}
  #allocation0 [shape = 'u32[]', space=smem, size = 0x4, offset = 0x4, fixed_abs, tag = 'smem constant byte address 0x4 - core index']
  #allocation1 [shape = 'u32[144,128]{1,0:T(1,128)}', space=vmem, size = 0x12000, scoped, tag = 'internal scratch']
  %s0 = inlined_call_operand.hbm [shape: f32[2,8,128], index: 0, kind: input, shape index: {}]
  %s1 = inlined_call_operand.hbm [shape: bf16[16,8], index: 1, kind: input, shape index: {}]
  %s2 = inlined_call_operand.hbm [shape: f32[16,1], index: 2, kind: input, shape index: {}]
  %s3 = inlined_call_operand.hbm [shape: f32[16,1], index: 3, kind: input, shape index: {}]
  %s4 = inlined_call_operand.hbm [shape: f32[16,1], index: 4, kind: input, shape index: {}]
  %s5 = inlined_call_operand.hbm [shape: bf16[8,16], index: 5, kind: input, shape index: {}]
  %s6 = inlined_call_operand.hbm [shape: f32[8,1], index: 6, kind: input, shape index: {}]
  %s7 = inlined_call_operand.hbm [shape: bf16[2,16,128], index: 7, kind: output, shape index: {0}]
  %s8 = inlined_call_operand.hbm [shape: bf16[2,8,128], index: 8, kind: output, shape index: {1}]
  %9 = xla_tuple %s7, %s8
  %s10 = sld [smem:[#allocation0]]
  $region97: #{tpu_custom_call.1} parent=0
    _
  %s12 = ssub.s32 1, %s10
  %s13 = scalar_select 0, %s12, %s10
  $region1: #{tpu_custom_call.1} parent=0
    #allocation2 [shape = 'u8[8192]{0}', space=vmem, size = 0x2000, scoped, tag = 'input window, operand 0']
    #allocation3 [shape = 's32[2]{0}', space=sflag, size = 0x8, scoped, tag = 'scoped memory for tpu_custom_call.1']
    #allocation4 [shape = 's32[2]{0}', space=sflag, size = 0x8, scoped, tag = 'scoped memory for tpu_custom_call.1']
    #allocation5 [shape = 'u8[4096]{0}', space=vmem, size = 0x1000, scoped, tag = 'input window, operand 1, single buffered']
    #allocation6 [shape = 's32[1]{0}', space=sflag, size = 0x4, scoped, tag = 'scoped memory for tpu_custom_call.1']
    #allocation7 [shape = 'u8[8192]{0}', space=vmem, size = 0x2000, scoped, tag = 'input window, operand 2, single buffered']
    #allocation8 [shape = 'u8[8192]{0}', space=vmem, size = 0x2000, scoped, tag = 'input window, operand 3, single buffered']
    #allocation9 [shape = 's32[1]{0}', space=sflag, size = 0x4, scoped, tag = 'scoped memory for tpu_custom_call.1']
    #allocation10 [shape = 'u8[8192]{0}', space=vmem, size = 0x2000, scoped, tag = 'input window, operand 4, single buffered']
    #allocation11 [shape = 'u8[2048]{0}', space=vmem, size = 0x800, scoped, tag = 'input window, operand 5, single buffered']
    #allocation12 [shape = 's32[1]{0}', space=sflag, size = 0x4, scoped, tag = 'scoped memory for tpu_custom_call.1']
    #allocation13 [shape = 'u8[4096]{0}', space=vmem, size = 0x1000, scoped, tag = 'input window, operand 6, single buffered']
    #allocation14 [shape = 'u8[8192]{0}', space=vmem, size = 0x2000, scoped, tag = 'output window, operand 0']
    #allocation15 [shape = 'u8[4096]{0}', space=vmem, size = 0x1000, scoped, tag = 'output window, operand 1']
    #allocation16 [shape = 's32[2]{0}', space=sflag, size = 0x8, scoped, tag = 'scoped memory for tpu_custom_call.1']
    %14 = vsyncpa [#allocation3], 0
    %s15 = scalar_lea.sflag [#allocation3], 1
    %16 = vsyncpa %s15, 0
    %17 = vsyncpa [#allocation6], 0
    %18 = vsyncpa [#allocation9], 0
    %19 = vsyncpa [#allocation12], 0
    %20 = vsyncpa [#allocation4], 0
    %s21 = scalar_lea.sflag [#allocation4], 1
    %22 = vsyncpa %s21, 0
    %23 = vsyncpa [#allocation16], 0
    %s24 = scalar_lea.sflag [#allocation16], 1
    %25 = vsyncpa %s24, 0
    loop: start=0, step=1, limit=4
    $region2: #{tpu_custom_call.1} parent=1 // loop_pre_header
      _
    $region3: #{tpu_custom_call.1} parent=1 // loop_header
      %s27 = sphi 0, %s31
      %p28 = scmp.ge.s32.totalorder %s27, 4
      %s34 = sphi 0, %s46
      %s35 = sphi 0, %s42
      %s36 = sphi 0, %s34
      %s37 = sphi 0, %s35
      %s38 = sphi 0, %s36
      %s39 = sphi 0, %s37
      %s51 = sphi 0, %s53
      %s54 = sphi 0, %s51
      %s55 = sphi 0, %s54
      %s71 = sphi 0, %s55
      %s75 = sphi 0, %s75
      %s77 = sphi 0, %s75
      %s78 = sphi 0, %s77
      %s92 = sphi 0, %s78
      %s96 = sphi 0, %s96
      %s98 = sphi 0, %s96
      %s99 = sphi 0, %s98
      %s113 = sphi 0, %s99
      %s117 = sphi 0, %s117
      %s119 = sphi 0, %s117
      %s120 = sphi 0, %s119
      %s134 = sphi 0, %s120
      %s138 = sphi 0, %s138
      %s140 = sphi 0, %s138
      %s141 = sphi 0, %s140
      %s155 = sphi 0, %s141
      %s159 = sphi 0, %s159
      %s161 = sphi 0, %s159
      %s162 = sphi 0, %s161
      %s176 = sphi 0, %s162
      %s180 = sphi 0, %s180
      %s182 = sphi 0, %s180
      %s183 = sphi 0, %s182
      %s197 = sphi 0, %s183
      %s205 = sphi 0, %s207
      %s208 = sphi 0, %s205
      %s209 = sphi 0, %s208
      %s225 = sphi 0, %s209
      %s233 = sphi 0, %s235
      %s236 = sphi 0, %s233
      %s237 = sphi 0, %s236
      %s253 = sphi 0, %s237
    $region4: #{tpu_custom_call.1} parent=1 // loop_header_branch
      %30 = sbr.rel (%p28) target = $region8
    $region5: #{tpu_custom_call.1} parent=1 // loop_body
      %s32 = ssub.s32 %s27, 1
      %s33 = ssub.s32 %s27, 2
      %s40 = sadd.s32 1, %s35
      %p41 = scmp.ge.s32.totalorder %s40, 1
      %s42 = scalar_select %p41, 0, %s40
      %s43 = sadd.s32 1, %s34
      %s44 = scalar_select %p41, %s43, %s34
      %p45 = scmp.ge.s32.totalorder %s44, 2
      %s46 = scalar_select %p45, 0, %s44
      %s47 = ssub.s32 %s34, %s46
      %s48 = ssub.s32 %s35, %s42
      %s49 = sor.u32 %s47, %s48
      %p50 = scmp.eq.s32.totalorder %s49, 0
      %s52 = sadd.s32 %s51, 1
      %s53 = scalar_select %p50, %s51, %s52
      %p56 = pneg %p50
      %p57 = scmp.eq.s32.totalorder %s27, 1
      %p58 = por %p56, %p57
      %p59 = scmp.ne.s32.totalorder %s51, %s54
      %p60 = scmp.eq.s32.totalorder %s27, 0
      %p61 = por %p59, %p60
      %p62 = scmp.ne.s32.totalorder %s51, %s54
      %p63 = scmp.eq.s32.totalorder %s32, 1
      %p64 = por %p62, %p63
      %p65 = scmp.ne.s32.totalorder %s54, %s55
      %p66 = scmp.eq.s32.totalorder %s32, 0
      %p67 = por %p65, %p66
      %p68 = scmp.ne.s32.totalorder %s54, %s55
      %p69 = scmp.eq.s32.totalorder %s33, 1
      %p70 = por %p68, %p69
      %p72 = scmp.ne.s32.totalorder %s55, %s71
      %p73 = scmp.eq.s32.totalorder %s33, 0
      %p74 = por %p72, %p73
      %s76 = sadd.s32 %s75, 1
      %p79 = scmp.eq.s32.totalorder %s27, 1
      %p80 = scmp.ne.s32.totalorder %s75, %s77
      %p81 = scmp.eq.s32.totalorder %s27, 0
      %p82 = por %p80, %p81
      %p83 = scmp.ne.s32.totalorder %s75, %s77
      %p84 = scmp.eq.s32.totalorder %s32, 1
      %p85 = por %p83, %p84
      %p86 = scmp.ne.s32.totalorder %s77, %s78
      %p87 = scmp.eq.s32.totalorder %s32, 0
      %p88 = por %p86, %p87
      %p89 = scmp.ne.s32.totalorder %s77, %s78
      %p90 = scmp.eq.s32.totalorder %s33, 1
      %p91 = por %p89, %p90
      %p93 = scmp.ne.s32.totalorder %s78, %s92
      %p94 = scmp.eq.s32.totalorder %s33, 0
      %p95 = por %p93, %p94
      %s97 = sadd.s32 %s96, 1
      %p100 = scmp.eq.s32.totalorder %s27, 1
      %p101 = scmp.ne.s32.totalorder %s96, %s98
      %p102 = scmp.eq.s32.totalorder %s27, 0
      %p103 = por %p101, %p102
      %p104 = scmp.ne.s32.totalorder %s96, %s98
      %p105 = scmp.eq.s32.totalorder %s32, 1
      %p106 = por %p104, %p105
      %p107 = scmp.ne.s32.totalorder %s98, %s99
      %p108 = scmp.eq.s32.totalorder %s32, 0
      %p109 = por %p107, %p108
      %p110 = scmp.ne.s32.totalorder %s98, %s99
      %p111 = scmp.eq.s32.totalorder %s33, 1
      %p112 = por %p110, %p111
      %p114 = scmp.ne.s32.totalorder %s99, %s113
      %p115 = scmp.eq.s32.totalorder %s33, 0
      %p116 = por %p114, %p115
      %s118 = sadd.s32 %s117, 1
      %p121 = scmp.eq.s32.totalorder %s27, 1
      %p122 = scmp.ne.s32.totalorder %s117, %s119
      %p123 = scmp.eq.s32.totalorder %s27, 0
      %p124 = por %p122, %p123
      %p125 = scmp.ne.s32.totalorder %s117, %s119
      %p126 = scmp.eq.s32.totalorder %s32, 1
      %p127 = por %p125, %p126
      %p128 = scmp.ne.s32.totalorder %s119, %s120
      %p129 = scmp.eq.s32.totalorder %s32, 0
      %p130 = por %p128, %p129
      %p131 = scmp.ne.s32.totalorder %s119, %s120
      %p132 = scmp.eq.s32.totalorder %s33, 1
      %p133 = por %p131, %p132
      %p135 = scmp.ne.s32.totalorder %s120, %s134
      %p136 = scmp.eq.s32.totalorder %s33, 0
      %p137 = por %p135, %p136
      %s139 = sadd.s32 %s138, 1
      %p142 = scmp.eq.s32.totalorder %s27, 1
      %p143 = scmp.ne.s32.totalorder %s138, %s140
      %p144 = scmp.eq.s32.totalorder %s27, 0
      %p145 = por %p143, %p144
      %p146 = scmp.ne.s32.totalorder %s138, %s140
      %p147 = scmp.eq.s32.totalorder %s32, 1
      %p148 = por %p146, %p147
      %p149 = scmp.ne.s32.totalorder %s140, %s141
      %p150 = scmp.eq.s32.totalorder %s32, 0
      %p151 = por %p149, %p150
      %p152 = scmp.ne.s32.totalorder %s140, %s141
      %p153 = scmp.eq.s32.totalorder %s33, 1
      %p154 = por %p152, %p153
      %p156 = scmp.ne.s32.totalorder %s141, %s155
      %p157 = scmp.eq.s32.totalorder %s33, 0
      %p158 = por %p156, %p157
      %s160 = sadd.s32 %s159, 1
      %p163 = scmp.eq.s32.totalorder %s27, 1
      %p164 = scmp.ne.s32.totalorder %s159, %s161
      %p165 = scmp.eq.s32.totalorder %s27, 0
      %p166 = por %p164, %p165
      %p167 = scmp.ne.s32.totalorder %s159, %s161
      %p168 = scmp.eq.s32.totalorder %s32, 1
      %p169 = por %p167, %p168
      %p170 = scmp.ne.s32.totalorder %s161, %s162
      %p171 = scmp.eq.s32.totalorder %s32, 0
      %p172 = por %p170, %p171
      %p173 = scmp.ne.s32.totalorder %s161, %s162
      %p174 = scmp.eq.s32.totalorder %s33, 1
      %p175 = por %p173, %p174
      %p177 = scmp.ne.s32.totalorder %s162, %s176
      %p178 = scmp.eq.s32.totalorder %s33, 0
      %p179 = por %p177, %p178
      %s181 = sadd.s32 %s180, 1
      %p184 = scmp.eq.s32.totalorder %s27, 1
      %p185 = scmp.ne.s32.totalorder %s180, %s182
      %p186 = scmp.eq.s32.totalorder %s27, 0
      %p187 = por %p185, %p186
      %p188 = scmp.ne.s32.totalorder %s180, %s182
      %p189 = scmp.eq.s32.totalorder %s32, 1
      %p190 = por %p188, %p189
      %p191 = scmp.ne.s32.totalorder %s182, %s183
      %p192 = scmp.eq.s32.totalorder %s32, 0
      %p193 = por %p191, %p192
      %p194 = scmp.ne.s32.totalorder %s182, %s183
      %p195 = scmp.eq.s32.totalorder %s33, 1
      %p196 = por %p194, %p195
      %p198 = scmp.ne.s32.totalorder %s183, %s197
      %p199 = scmp.eq.s32.totalorder %s33, 0
      %p200 = por %p198, %p199
      %s201 = ssub.s32 %s34, %s46
      %s202 = ssub.s32 %s35, %s42
      %s203 = sor.u32 %s201, %s202
      %p204 = scmp.eq.s32.totalorder %s203, 0
      %s206 = sadd.s32 %s205, 1
      %s207 = scalar_select %p204, %s205, %s206
      %p210 = pneg %p204
      %p211 = scmp.eq.s32.totalorder %s27, 1
      %p212 = por %p210, %p211
      %p213 = scmp.ne.s32.totalorder %s205, %s208
      %p214 = scmp.eq.s32.totalorder %s27, 0
      %p215 = por %p213, %p214
      %p216 = scmp.ne.s32.totalorder %s205, %s208
      %p217 = scmp.eq.s32.totalorder %s32, 1
      %p218 = por %p216, %p217
      %p219 = scmp.ne.s32.totalorder %s208, %s209
      %p220 = scmp.eq.s32.totalorder %s32, 0
      %p221 = por %p219, %p220
      %p222 = scmp.ne.s32.totalorder %s208, %s209
      %p223 = scmp.eq.s32.totalorder %s33, 1
      %p224 = por %p222, %p223
      %p226 = scmp.ne.s32.totalorder %s209, %s225
      %p227 = scmp.eq.s32.totalorder %s33, 0
      %p228 = por %p226, %p227
      %s229 = ssub.s32 %s34, %s46
      %s230 = ssub.s32 %s35, %s42
      %s231 = sor.u32 %s229, %s230
      %p232 = scmp.eq.s32.totalorder %s231, 0
      %s234 = sadd.s32 %s233, 1
      %s235 = scalar_select %p232, %s233, %s234
      %p238 = pneg %p232
      %p239 = scmp.eq.s32.totalorder %s27, 1
      %p240 = por %p238, %p239
      %p241 = scmp.ne.s32.totalorder %s233, %s236
      %p242 = scmp.eq.s32.totalorder %s27, 0
      %p243 = por %p241, %p242
      %p244 = scmp.ne.s32.totalorder %s233, %s236
      %p245 = scmp.eq.s32.totalorder %s32, 1
      %p246 = por %p244, %p245
      %p247 = scmp.ne.s32.totalorder %s236, %s237
      %p248 = scmp.eq.s32.totalorder %s32, 0
      %p249 = por %p247, %p248
      %p250 = scmp.ne.s32.totalorder %s236, %s237
      %p251 = scmp.eq.s32.totalorder %s33, 1
      %p252 = por %p250, %p251
      %p254 = scmp.ne.s32.totalorder %s237, %s253
      %p255 = scmp.eq.s32.totalorder %s33, 0
      %p256 = por %p254, %p255
      %p257 = scmp.le.s32.totalorder 1, %s27
      %p258 = scmp.lt.s32.totalorder %s27, 3
      %p259 = pnand %p257, %p258
      %p260 = pneg %p259
      // Predicated region
      $region9: #{tpu_custom_call.1} parent=5 // pred_check
        _
      $region10: #{tpu_custom_call.1} parent=5 // pred_check_branch
        %262 = sbr.rel (%p259) target = $region12
      $region11: #{tpu_custom_call.1} parent=5 // pred_region
        %s263 = ssub.s32 %s27, 1
        // Predicated region
        $region13: #{tpu_custom_call.1} parent=11 // pred_check
          %p264 = pneg %p88
        $region14: #{tpu_custom_call.1} parent=11 // pred_check_branch
          %266 = sbr.rel (%p264) target = $region16
        $region15: #{tpu_custom_call.1} parent=11 // pred_region
          %s268 = ssub.s32 128, 128
          %269 = vsyncadd [#allocation6], %s268
          %s270 = sshll.u32 [#allocation5], 4
          %s271 = int_to_ptr.vmem [resolvable:$true] %s270
          %276 = dma.hbm_to_vmem [thread:$0]  %s1, 128, %s271, [#allocation6], 64, 64, 4
        $region16: #{tpu_custom_call.1} parent=11 // pred_fallthru
          _
        // Predicated region
        $region17: #{tpu_custom_call.1} parent=11 // pred_check
          %p277 = pneg %p109
        $region18: #{tpu_custom_call.1} parent=11 // pred_check_branch
          %279 = sbr.rel (%p277) target = $region20
        $region19: #{tpu_custom_call.1} parent=11 // pred_region
          %s281 = ssub.s32 256, 256
          %282 = vsyncadd [#allocation6], %s281
          %s283 = sshll.u32 [#allocation7], 4
          %s284 = int_to_ptr.vmem [resolvable:$true] %s283
          %289 = dma.hbm_to_vmem [thread:$0]  %s2, 256, %s284, [#allocation6], 128, 128, 8
        $region20: #{tpu_custom_call.1} parent=11 // pred_fallthru
          _
        // Predicated region
        $region21: #{tpu_custom_call.1} parent=11 // pred_check
          %p290 = pneg %p130
        $region22: #{tpu_custom_call.1} parent=11 // pred_check_branch
          %292 = sbr.rel (%p290) target = $region24
        $region23: #{tpu_custom_call.1} parent=11 // pred_region
          %s294 = ssub.s32 256, 256
          %295 = vsyncadd [#allocation9], %s294
          %s296 = sshll.u32 [#allocation8], 4
          %s297 = int_to_ptr.vmem [resolvable:$true] %s296
          %302 = dma.hbm_to_vmem [thread:$0]  %s3, 256, %s297, [#allocation9], 128, 128, 8
        $region24: #{tpu_custom_call.1} parent=11 // pred_fallthru
          _
        // Predicated region
        $region25: #{tpu_custom_call.1} parent=11 // pred_check
          %p303 = pneg %p151
        $region26: #{tpu_custom_call.1} parent=11 // pred_check_branch
          %305 = sbr.rel (%p303) target = $region28
        $region27: #{tpu_custom_call.1} parent=11 // pred_region
          %s307 = ssub.s32 256, 256
          %308 = vsyncadd [#allocation9], %s307
          %s309 = sshll.u32 [#allocation10], 4
          %s310 = int_to_ptr.vmem [resolvable:$true] %s309
          %315 = dma.hbm_to_vmem [thread:$0]  %s4, 256, %s310, [#allocation9], 128, 128, 8
        $region28: #{tpu_custom_call.1} parent=11 // pred_fallthru
          _
        // Predicated region
        $region29: #{tpu_custom_call.1} parent=11 // pred_check
          %p316 = pneg %p172
        $region30: #{tpu_custom_call.1} parent=11 // pred_check_branch
          %318 = sbr.rel (%p316) target = $region32
        $region31: #{tpu_custom_call.1} parent=11 // pred_region
          %s320 = ssub.s32 64, 64
          %321 = vsyncadd [#allocation12], %s320
          %s323 = sshll.u32 [#allocation11], 4
          %s324 = int_to_ptr.vmem [resolvable:$true] %s323
          %326 = dma.hbm_to_vmem [thread:$0]  %s5, 64, %s324, [#allocation12]
        $region32: #{tpu_custom_call.1} parent=11 // pred_fallthru
          _
        // Predicated region
        $region33: #{tpu_custom_call.1} parent=11 // pred_check
          %p327 = pneg %p193
        $region34: #{tpu_custom_call.1} parent=11 // pred_check_branch
          %329 = sbr.rel (%p327) target = $region36
        $region35: #{tpu_custom_call.1} parent=11 // pred_region
          %s331 = ssub.s32 128, 128
          %332 = vsyncadd [#allocation12], %s331
          %s334 = sshll.u32 [#allocation13], 4
          %s335 = int_to_ptr.vmem [resolvable:$true] %s334
          %337 = dma.hbm_to_vmem [thread:$0]  %s6, 128, %s335, [#allocation12]
        $region36: #{tpu_custom_call.1} parent=11 // pred_fallthru
          _
      $region12: #{tpu_custom_call.1} parent=5 // pred_fallthru
        _
      %p338 = scmp.lt.s32.totalorder %s27, 2
      // Predicated region
      $region37: #{tpu_custom_call.1} parent=5 // pred_check
        %p339 = pneg %p338
      $region38: #{tpu_custom_call.1} parent=5 // pred_check_branch
        %341 = sbr.rel (%p339) target = $region40
      $region39: #{tpu_custom_call.1} parent=5 // pred_region
        // Predicated region
        $region41: #{tpu_custom_call.1} parent=39 // pred_check
          %p342 = pneg %p61
        $region42: #{tpu_custom_call.1} parent=39 // pred_check_branch
          %344 = sbr.rel (%p342) target = $region44
        $region43: #{tpu_custom_call.1} parent=39 // pred_region
          %s345 = sand.u32 %s51, 1
          %s346 = scalar_lea.sflag [#allocation3], %s345
          %s347 = sand.u32 %s51, 1
          %s348 = smul.addr %s347, 8
          %s349 = scalar_lea.vmem [#allocation2], %s348
          %s351 = ssub.s32 128, 128
          %352 = vsyncadd %s346, %s351
          %s353 = sadd.s32 %s35, %s34
          %s354 = smul.addr %s353, 128
          %s355 = scalar_lea.hbm %s0, %s354
          %s357 = sshll.u32 %s349, 4
          %s358 = int_to_ptr.vmem [resolvable:$true] %s357
          %360 = dma.hbm_to_vmem [thread:$0]  %s355, 128, %s358, %s346
        $region44: #{tpu_custom_call.1} parent=39 // pred_fallthru
          _
      $region40: #{tpu_custom_call.1} parent=5 // pred_fallthru
        _
      %p361 = scmp.le.s32.totalorder 1, %s27
      %p362 = scmp.lt.s32.totalorder %s27, 3
      %p363 = pnand %p361, %p362
      %p364 = pneg %p363
      // Predicated region
      $region45: #{tpu_custom_call.1} parent=5 // pred_check
        _
      $region46: #{tpu_custom_call.1} parent=5 // pred_check_branch
        %366 = sbr.rel (%p363) target = $region48
      $region47: #{tpu_custom_call.1} parent=5 // pred_region
        %s367 = ssub.s32 %s27, 1
        %s368 = sand.u32 %s54, 1
        %s369 = scalar_lea.sflag [#allocation3], %s368
        %s370 = sand.u32 %s54, 1
        %s371 = smul.addr %s370, 8
        %s372 = scalar_lea.vmem [#allocation2], %s371
        // Predicated region
        $region49: #{tpu_custom_call.1} parent=47 // pred_check
          %p373 = pneg %p67
        $region50: #{tpu_custom_call.1} parent=47 // pred_check_branch
          %375 = sbr.rel (%p373) target = $region52
        $region51: #{tpu_custom_call.1} parent=47 // pred_region
          %376 = dma.done %s369, 128
        $region52: #{tpu_custom_call.1} parent=47 // pred_fallthru
          _
        // Predicated region
        $region53: #{tpu_custom_call.1} parent=47 // pred_check
          %p377 = pneg %p88
        $region54: #{tpu_custom_call.1} parent=47 // pred_check_branch
          %379 = sbr.rel (%p377) target = $region56
        $region55: #{tpu_custom_call.1} parent=47 // pred_region
          %380 = dma.done [#allocation6], 128
        $region56: #{tpu_custom_call.1} parent=47 // pred_fallthru
          _
        // Predicated region
        $region57: #{tpu_custom_call.1} parent=47 // pred_check
          %p381 = pneg %p109
        $region58: #{tpu_custom_call.1} parent=47 // pred_check_branch
          %383 = sbr.rel (%p381) target = $region60
        $region59: #{tpu_custom_call.1} parent=47 // pred_region
          %384 = dma.done [#allocation6], 256
        $region60: #{tpu_custom_call.1} parent=47 // pred_fallthru
          _
        // Predicated region
        $region61: #{tpu_custom_call.1} parent=47 // pred_check
          %p385 = pneg %p130
        $region62: #{tpu_custom_call.1} parent=47 // pred_check_branch
          %387 = sbr.rel (%p385) target = $region64
        $region63: #{tpu_custom_call.1} parent=47 // pred_region
          %388 = dma.done [#allocation9], 256
        $region64: #{tpu_custom_call.1} parent=47 // pred_fallthru
          _
        // Predicated region
        $region65: #{tpu_custom_call.1} parent=47 // pred_check
          %p389 = pneg %p151
        $region66: #{tpu_custom_call.1} parent=47 // pred_check_branch
          %391 = sbr.rel (%p389) target = $region68
        $region67: #{tpu_custom_call.1} parent=47 // pred_region
          %392 = dma.done [#allocation9], 256
        $region68: #{tpu_custom_call.1} parent=47 // pred_fallthru
          _
        // Predicated region
        $region69: #{tpu_custom_call.1} parent=47 // pred_check
          %p393 = pneg %p172
        $region70: #{tpu_custom_call.1} parent=47 // pred_check_branch
          %395 = sbr.rel (%p393) target = $region72
        $region71: #{tpu_custom_call.1} parent=47 // pred_region
          %396 = dma.done [#allocation12], 64
        $region72: #{tpu_custom_call.1} parent=47 // pred_fallthru
          _
        // Predicated region
        $region73: #{tpu_custom_call.1} parent=47 // pred_check
          %p397 = pneg %p193
        $region74: #{tpu_custom_call.1} parent=47 // pred_check_branch
          %399 = sbr.rel (%p397) target = $region76
        $region75: #{tpu_custom_call.1} parent=47 // pred_region
          %400 = dma.done [#allocation12], 128
        $region76: #{tpu_custom_call.1} parent=47 // pred_fallthru
          _
        %s401 = sand.u32 %s54, 1
        %s402 = scalar_lea.sflag [#allocation3], %s401
        %s403 = sand.u32 %s54, 1
        %s404 = smul.addr %s403, 8
        %s405 = scalar_lea.vmem [#allocation2], %s404
        %p406 = pneg %p67
        %p407 = pneg %p64
        %p408 = pneg %p88
        %p409 = pneg %p85
        %p410 = pneg %p109
        %p411 = pneg %p106
        %p412 = pneg %p130
        %p413 = pneg %p127
        %p414 = pneg %p151
        %p415 = pneg %p148
        %p416 = pneg %p172
        %p417 = pneg %p169
        %p418 = pneg %p193
        %p419 = pneg %p190
        %p420 = pneg %p221
        %p421 = pneg %p218
        %s422 = sand.u32 %s208, 1
        %s423 = scalar_lea.sflag [#allocation4], %s422
        %s424 = sand.u32 %s208, 1
        %s425 = smul.addr %s424, 8
        %s426 = scalar_lea.vmem [#allocation14], %s425
        %p427 = pneg %p249
        %p428 = pneg %p246
        %s429 = sand.u32 %s236, 1
        %s430 = scalar_lea.sflag [#allocation16], %s429
        %s431 = sand.u32 %s236, 1
        %s432 = smul.addr %s431, 4
        %s433 = scalar_lea.vmem [#allocation15], %s432
        %v435 = vld [vmem:[%s372] sm:$0xff]
        %s436 = smul.u32 %s37, 128
        %v437 = vlaneseq
        %v438 = vand.u32 %v437, 127
        %v439 = vstv %s436
        %v440 = vadd.s32 %v439, %v438
        %vm441 = vcmp.lt.s32.totalorder %v440, 16
        %v442 = vld [vmem:[#allocation5] sm:$0xf]
        %v443 = vld [vmem:[#allocation5 + $0x4] sm:$0xf]
        %v444 = vpack.c.bf16 %v435, %v435
        %v445 = vld [vmem:[#allocation7] sm:$0xff]
        %v446 = vld [vmem:[#allocation7 + $0x8] sm:$0xff]
        %448 = vset.pattern.permute.xlu0 0
        %449 = vperm.xlu0 %448, %v445
        %v450 = vpop.permute.xlu0 %449
        %453 = vset.pattern.permute.xlu0 0
        %454 = vperm.xlu0 %453, %v446
        %v455 = vpop.permute.xlu0 %454
        %v459 = vunpack.c.l.b16 %v442
        %v460 = vunpack.c.l.b16 %v443
        %v461 = vpack.c.b16 %v460, %v459
        %vm462 = vcmask 64512
        %v464 = vsel %vm462, %v461, 0
        %vm466 = vcmask 1043456
        %v468 = vsel %vm466, %v444, 0
        %470 = vmatprep.subr.bf16.mxu0 0
        %471 = vmatpush1.bf16.msra.mxu0 %v468
        %472 = vmatprep.subr.bf16.mxu0 0
        %473 = vmatpush1.bf16.msra.mxu0 0
        %474 = vmatprep.subr.bf16.mxu0 0
        %475 = vmatpush1.bf16.msra.mxu0 0
        %476 = vmatprep.subr.bf16.mxu0 0
        %477 = vmatpush1.bf16.msra.mxu0 0
        %478 = vmatprep.subr.bf16.mxu0 0
        %479 = vmatpush1.bf16.msra.mxu0 0
        %480 = vmatprep.subr.bf16.mxu0 0
        %481 = vmatpush1.bf16.msra.mxu0 0
        %482 = vmatprep.subr.bf16.mxu0 0
        %483 = vmatpush1.bf16.msra.mxu0 0
        %484 = vmatprep.subr.bf16.mxu0 0
        %485 = vmatpush1.bf16.msra.mxu0 0
        %486 = vmatprep.subr.bf16.mxu0 0
        %487 = vmatpush1.bf16.msra.mxu0 0
        %488 = vmatprep.subr.bf16.mxu0 0
        %489 = vmatpush1.bf16.msra.mxu0 0
        %490 = vmatprep.subr.bf16.mxu0 0
        %491 = vmatpush1.bf16.msra.mxu0 0
        %492 = vmatprep.subr.bf16.mxu0 0
        %493 = vmatpush1.bf16.msra.mxu0 0
        %494 = vmatprep.subr.bf16.mxu0 0
        %495 = vmatpush1.bf16.msra.mxu0 0
        %496 = vmatprep.subr.bf16.mxu0 0
        %497 = vmatpush1.bf16.msra.mxu0 0
        %498 = vmatprep.subr.bf16.mxu0 0
        %499 = vmatpush1.bf16.msra.mxu0 0
        %500 = vmatprep.subr.bf16.mxu0 0
        %501 = vmatpush1.bf16.msra.mxu0 0
        %502 = vmatprep.mubr.bf16.mxu0 0
        %503 = vmatmul.mubr.bf16.gmra.mrb[0].mxu0 %v464
        %v504 = vpop.f32.mrb[0].mxu0
        %v505 = vadd.f32 %v450, %v504
        %v506 = vpop.f32.mrb[0].mxu0
        %v507 = vpop.f32.mrb[0].mxu0
        %v508 = vadd.f32 %v455, %v507
        %v509 = vpop.f32.mrb[0].mxu0
        %510 = vdwg.mxu0
        %v511 = vsel %vm441, 1, 0
        %vm512 = vcmp.eq.s32.totalorder %v511, 1
        %v513 = vsel %vm512, %v505, 0.0
        %v514 = vsel %vm512, %v508, 0.0
        %v515 = vpack.c.bf16 %v514, %v513
        %v517 = vunpack.c.l.b16 %v515
        %v518 = vunpack.c.h.b16 %v515
        %v519 = vpack.c.b16 %v517, %v517
        %v520 = vpack.c.b16 %v518, %v518
        %523 = vst [vmem:[%s426] sm:$0xf] %v519
        %524 = vst [vmem:[%s426 + $0x4] sm:$0xf] %v520
        %v525 = vadd.f32 %v513, %v514
        %v526 = vrot.slane %v525, 4
        %v527 = vadd.f32 %v525, %v526
        %v528 = vrot.slane %v527, 2
        %v529 = vadd.f32 %v527, %v528
        %v530 = vrot.slane %v529, 1
        %v531 = vadd.f32 %v529, %v530
        %v532 = vrcp.pop 16.0
        %v533 = vmul.f32 %v531, %v532
        %v534 = vmul.f32 %v513, %v513
        %v535 = vmul.f32 %v514, %v514
        %v536 = vadd.f32 %v534, %v535
        %v537 = vrot.slane %v536, 4
        %v538 = vadd.f32 %v536, %v537
        %v539 = vrot.slane %v538, 2
        %v540 = vadd.f32 %v538, %v539
        %v541 = vrot.slane %v540, 1
        %v542 = vadd.f32 %v540, %v541
        %v543 = vmul.f32 %v542, %v532
        %v544 = vmul.f32 %v533, %v533
        %v545 = vsub.f32 %v543, %v544
        %v546 = vmax.f32 %v545, 0.0
        %v547 = vld [vmem:[#allocation8] sm:$0xff]
        %v548 = vld [vmem:[#allocation8 + $0x8] sm:$0xff]
        %v549 = vsub.f32 %v513, %v533
        %v550 = vsub.f32 %v514, %v533
        %552 = vset.pattern.permute.xlu0 0
        %553 = vperm.xlu0 %552, %v547
        %v554 = vpop.permute.xlu0 %553
        %557 = vset.pattern.permute.xlu0 0
        %558 = vperm.xlu0 %557, %v548
        %v559 = vpop.permute.xlu0 %558
        %v561 = vmul.f32 %v554, %v549
        %v562 = vmul.f32 %v559, %v550
        %v563 = vadd.f32 %v546, 1e-05
        %v564 = vrsqrt.pop %v563
        %v565 = vmul.f32 %v561, %v564
        %v566 = vmul.f32 %v562, %v564
        %v567 = vld [vmem:[#allocation10] sm:$0xff]
        %v568 = vld [vmem:[#allocation10 + $0x8] sm:$0xff]
        %570 = vset.pattern.permute.xlu0 0
        %571 = vperm.xlu0 %570, %v567
        %v572 = vpop.permute.xlu0 %571
        %575 = vset.pattern.permute.xlu0 0
        %576 = vperm.xlu0 %575, %v568
        %v577 = vpop.permute.xlu0 %576
        %v579 = vadd.f32 %v565, %v572
        %v580 = vadd.f32 %v566, %v577
        %v581 = vld [vmem:[#allocation11] sm:$0xf]
        %v582 = vpack.c.bf16 %v580, %v579
        %v583 = vld [vmem:[#allocation13] sm:$0xff]
        %585 = vset.pattern.permute.xlu0 0
        %586 = vperm.xlu0 %585, %v583
        %v587 = vpop.permute.xlu0 %586
        %vm589 = vcmask 130048
        %v591 = vsel %vm589, %v581, 0
        %593 = vmatprep.subr.bf16.mxu0 0
        %594 = vmatpush1.bf16.msra.mxu0 %v582
        %595 = vmatprep.subr.bf16.mxu0 0
        %596 = vmatpush1.bf16.msra.mxu0 0
        %597 = vmatprep.subr.bf16.mxu0 0
        %598 = vmatpush1.bf16.msra.mxu0 0
        %599 = vmatprep.subr.bf16.mxu0 0
        %600 = vmatpush1.bf16.msra.mxu0 0
        %601 = vmatprep.subr.bf16.mxu0 0
        %602 = vmatpush1.bf16.msra.mxu0 0
        %603 = vmatprep.subr.bf16.mxu0 0
        %604 = vmatpush1.bf16.msra.mxu0 0
        %605 = vmatprep.subr.bf16.mxu0 0
        %606 = vmatpush1.bf16.msra.mxu0 0
        %607 = vmatprep.subr.bf16.mxu0 0
        %608 = vmatpush1.bf16.msra.mxu0 0
        %609 = vmatprep.subr.bf16.mxu0 0
        %610 = vmatpush1.bf16.msra.mxu0 0
        %611 = vmatprep.subr.bf16.mxu0 0
        %612 = vmatpush1.bf16.msra.mxu0 0
        %613 = vmatprep.subr.bf16.mxu0 0
        %614 = vmatpush1.bf16.msra.mxu0 0
        %615 = vmatprep.subr.bf16.mxu0 0
        %616 = vmatpush1.bf16.msra.mxu0 0
        %617 = vmatprep.subr.bf16.mxu0 0
        %618 = vmatpush1.bf16.msra.mxu0 0
        %619 = vmatprep.subr.bf16.mxu0 0
        %620 = vmatpush1.bf16.msra.mxu0 0
        %621 = vmatprep.subr.bf16.mxu0 0
        %622 = vmatpush1.bf16.msra.mxu0 0
        %623 = vmatprep.subr.bf16.mxu0 0
        %624 = vmatpush1.bf16.msra.mxu0 0
        %625 = vmatprep.mubr.bf16.mxu0 0
        %626 = vmatmul.mubr.bf16.gmra.mrb[0].mxu0 %v591
        %v627 = vpop.f32.mrb[0].mxu0
        %v628 = vadd.f32 %v587, %v627
        %v629 = vpop.f32.mrb[0].mxu0
        %v630 = vpop.f32.mrb[0].mxu0
        %v631 = vpop.f32.mrb[0].mxu0
        %632 = vdwg.mxu0
        %v633 = vsel %vm512, %v628, 0.0
        %v634 = vpack.c.bf16 %v633, %v633
        %635 = vst [vmem:[%s433] sm:$0xf] %v634
        %s636 = sand.u32 %s208, 1
        %s637 = scalar_lea.sflag [#allocation4], %s636
        %s638 = sand.u32 %s208, 1
        %s639 = smul.addr %s638, 8
        %s640 = scalar_lea.vmem [#allocation14], %s639
        %s641 = sand.u32 %s236, 1
        %s642 = scalar_lea.sflag [#allocation16], %s641
        %s643 = sand.u32 %s236, 1
        %s644 = smul.addr %s643, 4
        %s645 = scalar_lea.vmem [#allocation15], %s644
        // Predicated region
        $region77: #{tpu_custom_call.1} parent=47 // pred_check
          %p646 = pneg %p218
        $region78: #{tpu_custom_call.1} parent=47 // pred_check_branch
          %648 = sbr.rel (%p646) target = $region80
        $region79: #{tpu_custom_call.1} parent=47 // pred_region
          %s650 = ssub.s32 128, 128
          %651 = vsyncadd %s637, %s650
          %s652 = smul.addr %s36, 2
          %s653 = sadd.s32 %s37, %s652
          %s654 = smul.addr %s653, 64
          %s655 = scalar_lea.hbm %s7, %s654
          %s656 = sshll.u32 %s640, 4
          %s657 = int_to_ptr.vmem [resolvable:$true] %s656
          %662 = dma.vmem_to_hbm [thread:$0]  %s657, 128, %s655, %s637, 64, 64, 4
        $region80: #{tpu_custom_call.1} parent=47 // pred_fallthru
          _
        // Predicated region
        $region81: #{tpu_custom_call.1} parent=47 // pred_check
          %p663 = pneg %p246
        $region82: #{tpu_custom_call.1} parent=47 // pred_check_branch
          %665 = sbr.rel (%p663) target = $region84
        $region83: #{tpu_custom_call.1} parent=47 // pred_region
          %s667 = ssub.s32 64, 64
          %668 = vsyncadd %s642, %s667
          %s669 = sadd.s32 %s37, %s36
          %s670 = smul.addr %s669, 64
          %s671 = scalar_lea.hbm %s8, %s670
          %s673 = sshll.u32 %s645, 4
          %s674 = int_to_ptr.vmem [resolvable:$true] %s673
          %676 = dma.vmem_to_hbm [thread:$0]  %s674, 64, %s671, %s642
        $region84: #{tpu_custom_call.1} parent=47 // pred_fallthru
          _
      $region48: #{tpu_custom_call.1} parent=5 // pred_fallthru
        _
      %p677 = scmp.le.s32.totalorder 2, %s27
      // Predicated region
      $region85: #{tpu_custom_call.1} parent=5 // pred_check
        %p678 = pneg %p677
      $region86: #{tpu_custom_call.1} parent=5 // pred_check_branch
        %680 = sbr.rel (%p678) target = $region88
      $region87: #{tpu_custom_call.1} parent=5 // pred_region
        %s681 = ssub.s32 %s27, 2
        // Predicated region
        $region89: #{tpu_custom_call.1} parent=87 // pred_check
          %p682 = pneg %p224
        $region90: #{tpu_custom_call.1} parent=87 // pred_check_branch
          %684 = sbr.rel (%p682) target = $region92
        $region91: #{tpu_custom_call.1} parent=87 // pred_region
          %s685 = sand.u32 %s209, 1
          %s686 = scalar_lea.sflag [#allocation4], %s685
          %s687 = sand.u32 %s209, 1
          %s688 = smul.addr %s687, 8
          %s689 = scalar_lea.vmem [#allocation14], %s688
          %690 = dma.done %s686, 128
        $region92: #{tpu_custom_call.1} parent=87 // pred_fallthru
          _
        // Predicated region
        $region93: #{tpu_custom_call.1} parent=87 // pred_check
          %p691 = pneg %p252
        $region94: #{tpu_custom_call.1} parent=87 // pred_check_branch
          %693 = sbr.rel (%p691) target = $region96
        $region95: #{tpu_custom_call.1} parent=87 // pred_region
          %s694 = sand.u32 %s237, 1
          %s695 = scalar_lea.sflag [#allocation16], %s694
          %s696 = sand.u32 %s237, 1
          %s697 = smul.addr %s696, 4
          %s698 = scalar_lea.vmem [#allocation15], %s697
          %699 = dma.done %s695, 64
        $region96: #{tpu_custom_call.1} parent=87 // pred_fallthru
          _
      $region88: #{tpu_custom_call.1} parent=5 // pred_fallthru
        _
    $region6: #{tpu_custom_call.1} parent=1 // loop_footer
      %s31 = sadd.s32 1, %s27
    $region7: #{tpu_custom_call.1} parent=1 // loop_footer_branch
      %26 = sbr.rel target = $region3
    $region8: #{tpu_custom_call.1} parent=1 // loop_exit
      _
    %700 = vsyncpa [#allocation3], 1
    %s701 = scalar_lea.sflag [#allocation3], 1
    %702 = vsyncpa %s701, 1
    %703 = vsyncpa [#allocation6], 1
    %704 = vsyncpa [#allocation9], 1
    %705 = vsyncpa [#allocation12], 1
    %706 = vsyncpa [#allocation4], 1
    %s707 = scalar_lea.sflag [#allocation4], 1
    %708 = vsyncpa %s707, 1
    %709 = vsyncpa [#allocation16], 1
    %s710 = scalar_lea.sflag [#allocation16], 1
    %711 = vsyncpa %s710, 1

</llo_original>
